<compile_context>
chip_gen: v7x
topology: tpu7x:2x2x1
jax: 0.10.0
libtpu: 0.0.40
codegen_flags: <defaults>
</compile_context>

<pallas_src>
import jax
import jax.numpy as jnp
from jax.experimental import pallas as pl
from jax.experimental.pallas import tpu as pltpu

INPUT_SIZE = 26
HIDDEN_SIZE = 15


def _round_up(x, m):
    return (x + m - 1) // m * m


def mlp_kernel(x_ref, w1_ref, b1_ref, w23_ref, b23_ref, o_ref):
    # x_ref: (INPUT_SIZE, TB)  -- batch on the lane axis (lane-dense DMA)
    # Layer 1 + ReLU: (HIDDEN_SIZE, TB)
    h = jnp.dot(w1_ref[...], x_ref[...], preferred_element_type=jnp.float32) + b1_ref[...]
    h = jnp.maximum(h, 0.0)
    # Layers 2 + 3 folded at eval time (Dropout p=0.5 is identity in eval): (1, TB)
    # TODO(synk): training-mode dropout (PRNG mask + 1/(1-p) scaling) not implemented; eval semantics.
    logits = jnp.dot(w23_ref[...], h, preferred_element_type=jnp.float32) + b23_ref[...]
    # Sigmoid via jax.nn.sigmoid (EUP exp path, numerically stable)
    o_ref[...] = jax.nn.sigmoid(logits).astype(o_ref.dtype)


def neural_network_forward(x, params, *, block_b=2048):
    """x: (B, INPUT_SIZE) float32. params hold PyTorch-layout weights (out_f, in_f) and (out_f,) biases."""
    B = x.shape[0]
    assert x.shape[1] == INPUT_SIZE

    w1, b1 = params["w1"], params["b1"]   # (H, IN), (H,)
    w2, b2 = params["w2"], params["b2"]   # (H, H),  (H,)
    w3, b3 = params["w3"], params["b3"]   # (1, H),  (1,)

    # Eval-time fusion of layers 2 & 3 (valid because Dropout is identity at eval).
    w23 = w3 @ w2                                           # (1, H)
    b23 = w3 @ b2.reshape(-1, 1) + b3.reshape(1, 1)         # (1, 1)
    b1c = b1.reshape(-1, 1)                                 # (H, 1)

    # Batch tile: multiple of 128 (lane width), capped at block_b; pad B up to a multiple of TB.
    TB = min(_round_up(block_b, 128), _round_up(max(B, 1), 128))
    B_pad = _round_up(B, TB)
    nb = B_pad // TB

    # Lane-dense transposed input: (INPUT_SIZE, B_pad), zero-padded tail columns.
    x_t = jnp.zeros((INPUT_SIZE, B_pad), x.dtype).at[:, :B].set(x.T)

    out_t = pl.pallas_call(
        mlp_kernel,
        out_shape=jax.ShapeDtypeStruct((1, B_pad), jnp.float32),
        grid_spec=pltpu.PrefetchScalarGridSpec(
            num_scalar_prefetch=0,
            grid=(nb,),
            in_specs=[
                pl.BlockSpec((INPUT_SIZE, TB), lambda i: (0, i)),             # x tile (pipelined)
                pl.BlockSpec((HIDDEN_SIZE, INPUT_SIZE), lambda i: (0, 0)),    # W1 (resident)
                pl.BlockSpec((HIDDEN_SIZE, 1), lambda i: (0, 0)),             # b1 (resident)
                pl.BlockSpec((1, HIDDEN_SIZE), lambda i: (0, 0)),             # W23 (resident)
                pl.BlockSpec((1, 1), lambda i: (0, 0)),                       # b23 (resident)
            ],
            out_specs=pl.BlockSpec((1, TB), lambda i: (0, i)),                # lane-dense output
        ),
        compiler_params=pltpu.CompilerParams(
            dimension_semantics=("parallel",),   # v7x: shard batch tiles across both TensorCores
        ),
    )(x_t, w1, b1c, w23, b23)

    return out_t[0, :B].reshape(B, 1)


def init_params(key):
    """Deterministic init mimicking PyTorch nn.Linear default U(-1/sqrt(fan_in), 1/sqrt(fan_in)).
    Weights kept in PyTorch layout (out_features, in_features)."""
    k1, k2, k3, k4, k5, k6 = jax.random.split(key, 6)

    def uniform(k, shape, fan_in):
        bound = 1.0 / jnp.sqrt(float(fan_in))
        return jax.random.uniform(k, shape, jnp.float32, -bound, bound)

    return {
        "w1": uniform(k1, (HIDDEN_SIZE, INPUT_SIZE), INPUT_SIZE),
        "b1": uniform(k2, (HIDDEN_SIZE,), INPUT_SIZE),
        "w2": uniform(k3, (HIDDEN_SIZE, HIDDEN_SIZE), HIDDEN_SIZE),
        "b2": uniform(k4, (HIDDEN_SIZE,), HIDDEN_SIZE),
        "w3": uniform(k5, (1, HIDDEN_SIZE), HIDDEN_SIZE),
        "b3": uniform(k6, (1,), HIDDEN_SIZE),
    }


def reference_forward(x, p):
    h = jnp.maximum(x @ p["w1"].T + p["b1"], 0.0)
    h = h @ p["w2"].T + p["b2"]           # Dropout is identity at eval
    logits = h @ p["w3"].T + p["b3"]
    return jax.nn.sigmoid(logits)


if __name__ == "__main__":
    key = jax.random.PRNGKey(0)
    pkey, xkey1, xkey2 = jax.random.split(key, 3)
    params = init_params(pkey)

    # Small test: B=8 (tail padding path, single grid step)
    B1 = 8
    x1 = jax.random.normal(xkey1, (B1, INPUT_SIZE), dtype=jnp.float32)
    out1 = jax.block_until_ready(neural_network_forward(x1, params))
    ref1 = reference_forward(x1, params)
    assert out1.shape == (B1, 1), out1.shape
    assert jnp.allclose(out1, ref1, atol=1e-5, rtol=1e-5)

    # Multi-tile test: B=300 with TB=128 -> 3 grid steps + padded tail
    B2 = 300
    x2 = jax.random.normal(xkey2, (B2, INPUT_SIZE), dtype=jnp.float32)
    out2 = jax.block_until_ready(neural_network_forward(x2, params, block_b=128))
    ref2 = reference_forward(x2, params)
    assert out2.shape == (B2, 1), out2.shape
    assert jnp.allclose(out2, ref2, atol=1e-5, rtol=1e-5)

    print("KERNEL_OK")
</pallas_src>

<mosaic_0001>
module attributes {stable_mosaic.version = 11 : i64} {
  func.func @mlp_kernel(%arg0: i32, %arg1: memref<26x128xf32, #tpu.memory_space<vmem>>, %arg2: memref<15x26xf32, #tpu.memory_space<vmem>>, %arg3: memref<15x1xf32, #tpu.memory_space<vmem>>, %arg4: memref<1x15xf32, #tpu.memory_space<vmem>>, %arg5: memref<1x1xf32, #tpu.memory_space<vmem>>, %arg6: memref<1x128xf32, #tpu.memory_space<vmem>>) attributes {dimension_semantics = [#tpu.dimension_semantics<parallel>], iteration_bounds = array<i64: 1>, scalar_prefetch = 0 : i64, scratch_operands = 0 : i64, tpu.core_type = #tpu.core_type<tc>, window_params = [{transform_indices = @transform_0, window_bounds = array<i64: 26, 128>}, {pipeline_mode = #tpu.pipeline_mode<synchronous>, transform_indices = @transform_1, window_bounds = array<i64: 15, 26>}, {pipeline_mode = #tpu.pipeline_mode<synchronous>, transform_indices = @transform_2, window_bounds = array<i64: 15, 1>}, {pipeline_mode = #tpu.pipeline_mode<synchronous>, transform_indices = @transform_3, window_bounds = array<i64: 1, 15>}, {pipeline_mode = #tpu.pipeline_mode<synchronous>, transform_indices = @transform_4, window_bounds = array<i64: 1, 1>}, {transform_indices = @transform_5, window_bounds = array<i64: 1, 128>}]} {
    %c0 = arith.constant 0 : index
    %c0_0 = arith.constant 0 : index
    %0 = vector.load %arg2[%c0, %c0_0] : memref<15x26xf32, #tpu.memory_space<vmem>>, vector<15x26xf32>
    %c0_1 = arith.constant 0 : index
    %c0_2 = arith.constant 0 : index
    %1 = vector.load %arg1[%c0_1, %c0_2] : memref<26x128xf32, #tpu.memory_space<vmem>>, vector<26x128xf32>
    %cst = arith.constant dense<0.000000e+00> : vector<15x128xf32>
    %2 = tpu.matmul %0, %1, %cst {dimension_numbers = #tpu.dot_dimension_numbers<[1], [0], [0], [1], [0, 0, 1, 1], [], []>} : vector<15x26xf32>, vector<26x128xf32>, vector<15x128xf32> -> vector<15x128xf32>
    %c0_3 = arith.constant 0 : index
    %c0_4 = arith.constant 0 : index
    %3 = vector.load %arg3[%c0_3, %c0_4] : memref<15x1xf32, #tpu.memory_space<vmem>>, vector<15x1xf32>
    %4 = vector.broadcast %3 : vector<15x1xf32> to vector<15x128xf32>
    %5 = arith.addf %2, %4 : vector<15x128xf32>
    %cst_5 = arith.constant 0.000000e+00 : f32
    %6 = vector.broadcast %cst_5 : f32 to vector<15x128xf32>
    %7 = arith.maximumf %5, %6 : vector<15x128xf32>
    %c0_6 = arith.constant 0 : index
    %c0_7 = arith.constant 0 : index
    %8 = vector.load %arg4[%c0_6, %c0_7] : memref<1x15xf32, #tpu.memory_space<vmem>>, vector<1x15xf32>
    %cst_8 = arith.constant dense<0.000000e+00> : vector<1x128xf32>
    %9 = tpu.matmul %8, %7, %cst_8 {dimension_numbers = #tpu.dot_dimension_numbers<[1], [0], [0], [1], [0, 0, 1, 1], [], []>} : vector<1x15xf32>, vector<15x128xf32>, vector<1x128xf32> -> vector<1x128xf32>
    %c0_9 = arith.constant 0 : index
    %c0_10 = arith.constant 0 : index
    %10 = vector.load %arg5[%c0_9, %c0_10] : memref<1x1xf32, #tpu.memory_space<vmem>>, vector<1x1xf32>
    %11 = vector.broadcast %10 : vector<1x1xf32> to vector<1x128xf32>
    %12 = arith.addf %9, %11 : vector<1x128xf32>
    %13 = arith.negf %12 : vector<1x128xf32>
    %14 = math.exp %13 : vector<1x128xf32>
    %cst_11 = arith.constant 1.000000e+00 : f32
    %15 = vector.broadcast %cst_11 : f32 to vector<1x128xf32>
    %16 = arith.addf %15, %14 : vector<1x128xf32>
    %17 = arith.divf %15, %16 : vector<1x128xf32>
    %c0_12 = arith.constant 0 : index
    %c0_13 = arith.constant 0 : index
    %18 = vector.load %arg6[%c0_12, %c0_13] : memref<1x128xf32, #tpu.memory_space<vmem>>, vector<1x128xf32>
    tpu.vector_store %arg6[%c0_12, %c0_13], %17 {strides = array<i32>} : memref<1x128xf32, #tpu.memory_space<vmem>>, vector<1x128xf32>,
    return
  }
  func.func @transform_0(%arg0: i32) -> (i32, i32) {
    %c0_i32 = arith.constant 0 : i32
    %c0_i32_0 = arith.constant 0 : i32
    return %c0_i32, %arg0 : i32, i32
  }
  func.func @transform_1(%arg0: i32) -> (i32, i32) {
    %c0_i32 = arith.constant 0 : i32
    %c0_i32_0 = arith.constant 0 : i32
    %c0_i32_1 = arith.constant 0 : i32
    return %c0_i32, %c0_i32_0 : i32, i32
  }
  func.func @transform_2(%arg0: i32) -> (i32, i32) {
    %c0_i32 = arith.constant 0 : i32
    %c0_i32_0 = arith.constant 0 : i32
    %c0_i32_1 = arith.constant 0 : i32
    return %c0_i32, %c0_i32_0 : i32, i32
  }
  func.func @transform_3(%arg0: i32) -> (i32, i32) {
    %c0_i32 = arith.constant 0 : i32
    %c0_i32_0 = arith.constant 0 : i32
    %c0_i32_1 = arith.constant 0 : i32
    return %c0_i32, %c0_i32_0 : i32, i32
  }
  func.func @transform_4(%arg0: i32) -> (i32, i32) {
    %c0_i32 = arith.constant 0 : i32
    %c0_i32_0 = arith.constant 0 : i32
    %c0_i32_1 = arith.constant 0 : i32
    return %c0_i32, %c0_i32_0 : i32, i32
  }
  func.func @transform_5(%arg0: i32) -> (i32, i32) {
    %c0_i32 = arith.constant 0 : i32
    %c0_i32_0 = arith.constant 0 : i32
    return %c0_i32, %arg0 : i32, i32
  }
}

</mosaic_0001>

<llo_original>
// kernel: tpu_custom_call.1
$region0: #{tpu_custom_call.1}
  #allocation0 [shape = 'u32[]', space=smem, size = 0x4, offset = 0x4, fixed_abs, tag = 'smem constant byte address 0x4 - core index']
  #allocation1 [shape = 'u32[144,128]{1,0:T(1,128)}', space=vmem, size = 0x12000, scoped, tag = 'internal scratch']
  #allocation2 [shape = 'f32[1,1]{1,0:T(1,128)S(1)}', space=vmem, size = 0x200, scoped, tag = 'scoped memory for tpu_custom_call.1']
  %s0 = inlined_call_operand.hbm [shape: f32[26,128], index: 0, kind: input, shape index: {}]
  %s1 = inlined_call_operand.vmem [shape: f32[15,26], index: 1, kind: input, shape index: {}]
  %s2 = inlined_call_operand.vmem [shape: f32[15,1], index: 2, kind: input, shape index: {}]
  %s3 = inlined_call_operand.vmem [shape: f32[1,15], index: 3, kind: input, shape index: {}]
  %s4 = inlined_call_operand.<no memory space> [shape: f32[1,1], index: 4, kind: input, shape index: {}]
  %s5 = inlined_call_operand.hbm [shape: f32[1,128], index: 5, kind: output, shape index: {}]
  %s6 = sld [smem:[#allocation0]]
  $region34: #{tpu_custom_call.1} parent=0
    _
  %s8 = ssub.s32 1, %s6
  %s9 = scalar_select 0, %s8, %s6
  %v10 = vstv %s4
  %11 = vst [vmem:[#allocation2] sm:$0x1] %v10
  $region1: #{tpu_custom_call.1} parent=0
    #allocation3 [shape = 'u8[16384]{0}', space=vmem, size = 0x4000, scoped, tag = 'input window, operand 0, single buffered']
    #allocation4 [shape = 's32[1]{0}', space=sflag, size = 0x4, scoped, tag = 'scoped memory for tpu_custom_call.1']
    #allocation5 [shape = 's32[1]{0}', space=sflag, size = 0x4, scoped, tag = 'scoped memory for tpu_custom_call.1']
    #allocation6 [shape = 'u8[512]{0}', space=vmem, size = 0x400, scoped, tag = 'output window, operand 0, single buffered']
    %12 = vsyncpa [#allocation4], 0
    %13 = vsyncpa [#allocation5], 0
    // Predicated region
    $region2: #{tpu_custom_call.1} parent=1 // pred_check
      _
    $region3: #{tpu_custom_call.1} parent=1 // pred_check_branch
      %15 = sbr.rel (0) target = $region5
    $region4: #{tpu_custom_call.1} parent=1 // pred_region
      %s17 = ssub.s32 512, 512
      %18 = vsyncadd [#allocation4], %s17
      %s19 = sshll.u32 [#allocation3], 4
      %s20 = int_to_ptr.vmem [resolvable:$true] %s19
      %25 = dma.hbm_to_vmem [thread:$0]  %s0, 512, %s20, [#allocation4], 128, 128, 8
    $region5: #{tpu_custom_call.1} parent=1 // pred_fallthru
      _
    // Predicated region
    $region6: #{tpu_custom_call.1} parent=1 // pred_check
      _
    $region7: #{tpu_custom_call.1} parent=1 // pred_check_branch
      %27 = sbr.rel (0) target = $region9
    $region8: #{tpu_custom_call.1} parent=1 // pred_region
      _
    $region9: #{tpu_custom_call.1} parent=1 // pred_fallthru
      _
    // Predicated region
    $region10: #{tpu_custom_call.1} parent=1 // pred_check
      _
    $region11: #{tpu_custom_call.1} parent=1 // pred_check_branch
      %29 = sbr.rel (0) target = $region13
    $region12: #{tpu_custom_call.1} parent=1 // pred_region
      _
    $region13: #{tpu_custom_call.1} parent=1 // pred_fallthru
      _
    // Predicated region
    $region14: #{tpu_custom_call.1} parent=1 // pred_check
      _
    $region15: #{tpu_custom_call.1} parent=1 // pred_check_branch
      %31 = sbr.rel (0) target = $region17
    $region16: #{tpu_custom_call.1} parent=1 // pred_region
      _
    $region17: #{tpu_custom_call.1} parent=1 // pred_fallthru
      _
    // Predicated region
    $region18: #{tpu_custom_call.1} parent=1 // pred_check
      _
    $region19: #{tpu_custom_call.1} parent=1 // pred_check_branch
      %33 = sbr.rel (0) target = $region21
    $region20: #{tpu_custom_call.1} parent=1 // pred_region
      _
    $region21: #{tpu_custom_call.1} parent=1 // pred_fallthru
      _
    // Predicated region
    $region22: #{tpu_custom_call.1} parent=1 // pred_check
      _
    $region23: #{tpu_custom_call.1} parent=1 // pred_check_branch
      %35 = sbr.rel (0) target = $region25
    $region24: #{tpu_custom_call.1} parent=1 // pred_region
      %36 = dma.done [#allocation4], 512
    $region25: #{tpu_custom_call.1} parent=1 // pred_fallthru
      _
    %v37 = vld [vmem:[%s1] sm:$0xff]
    %v38 = vld [vmem:[%s1 + $0x8] sm:$0x7f]
    %v39 = vld [vmem:[#allocation3] sm:$0xff]
    %v40 = vld [vmem:[#allocation3 + $0x8] sm:$0xff]
    %v41 = vld [vmem:[#allocation3 + $0x10] sm:$0xff]
    %v42 = vld [vmem:[#allocation3 + $0x18] sm:$0x3]
    %v43 = vld [vmem:[%s2] sm:$0xff]
    %v44 = vld [vmem:[%s2 + $0x8] sm:$0x7f]
    %46 = vset.pattern.permute.xlu0 0
    %47 = vperm.xlu0 %46, %v43
    %v48 = vpop.permute.xlu0 %47
    %51 = vset.pattern.permute.xlu0 0
    %52 = vperm.xlu0 %51, %v44
    %v53 = vpop.permute.xlu0 %52
    %vm55 = vcmask 211968
    %v57 = vsel %vm55, %v37, 0
    %v60 = vsel %vm55, %v38, 0
    %vm62 = vcmask 1041408
    %v64 = vsel %vm62, %v42, 0
    %66 = vmatprep.subr.mxu0 0.0
    %67 = vmatpush1.msra.mxu0 %v39
    %68 = vmatprep.subr.mxu0 0.0
    %69 = vmatpush1.msra.mxu0 %v40
    %70 = vmatprep.subr.mxu0 0.0
    %71 = vmatpush1.msra.mxu0 %v41
    %72 = vmatprep.subr.mxu0 0.0
    %73 = vmatpush1.msra.mxu0 %v64
    %74 = vmatprep.subr.mxu0 0.0
    %75 = vmatpush1.msra.mxu0 0.0
    %76 = vmatprep.subr.mxu0 0.0
    %77 = vmatpush1.msra.mxu0 0.0
    %78 = vmatprep.subr.mxu0 0.0
    %79 = vmatpush1.msra.mxu0 0.0
    %80 = vmatprep.subr.mxu0 0.0
    %81 = vmatpush1.msra.mxu0 0.0
    %82 = vmatprep.subr.mxu0 0.0
    %83 = vmatpush1.msra.mxu0 0.0
    %84 = vmatprep.subr.mxu0 0.0
    %85 = vmatpush1.msra.mxu0 0.0
    %86 = vmatprep.subr.mxu0 0.0
    %87 = vmatpush1.msra.mxu0 0.0
    %88 = vmatprep.subr.mxu0 0.0
    %89 = vmatpush1.msra.mxu0 0.0
    %90 = vmatprep.subr.mxu0 0.0
    %91 = vmatpush1.msra.mxu0 0.0
    %92 = vmatprep.subr.mxu0 0.0
    %93 = vmatpush1.msra.mxu0 0.0
    %94 = vmatprep.subr.mxu0 0.0
    %95 = vmatpush1.msra.mxu0 0.0
    %96 = vmatprep.subr.mxu0 0.0
    %97 = vmatpush1.msra.mxu0 0.0
    %98 = vmatprep.subr.mxu0 0.0
    %99 = vmatpush1.msra.mxu0 0.0
    %100 = vmatprep.subr.mxu0 0.0
    %101 = vmatpush1.msra.mxu0 0.0
    %102 = vmatprep.subr.mxu0 0.0
    %103 = vmatpush1.msra.mxu0 0.0
    %104 = vmatprep.subr.mxu0 0.0
    %105 = vmatpush1.msra.mxu0 0.0
    %106 = vmatprep.subr.mxu0 0.0
    %107 = vmatpush1.msra.mxu0 0.0
    %108 = vmatprep.subr.mxu0 0.0
    %109 = vmatpush1.msra.mxu0 0.0
    %110 = vmatprep.subr.mxu0 0.0
    %111 = vmatpush1.msra.mxu0 0.0
    %112 = vmatprep.subr.mxu0 0.0
    %113 = vmatpush1.msra.mxu0 0.0
    %114 = vmatprep.subr.mxu0 0.0
    %115 = vmatpush1.msra.mxu0 0.0
    %116 = vmatprep.subr.mxu0 0.0
    %117 = vmatpush1.msra.mxu0 0.0
    %118 = vmatprep.subr.mxu0 0.0
    %119 = vmatpush1.msra.mxu0 0.0
    %120 = vmatprep.subr.mxu0 0.0
    %121 = vmatpush1.msra.mxu0 0.0
    %122 = vmatprep.subr.mxu0 0.0
    %123 = vmatpush1.msra.mxu0 0.0
    %124 = vmatprep.subr.mxu0 0.0
    %125 = vmatpush1.msra.mxu0 0.0
    %126 = vmatprep.subr.mxu0 0.0
    %127 = vmatpush1.msra.mxu0 0.0
    %128 = vmatprep.subr.mxu0 0.0
    %129 = vmatpush1.msra.mxu0 0.0
    %130 = vmatprep.mubr.f32.mxu0 0.0
    %131 = vmatmul.mubr.f32.gmra.mrb[0].mxu0 %v57
    %v132 = vpop.f32.mrb[0].mxu0
    %v133 = vadd.f32 %v48, %v132
    %v134 = vpop.f32.mrb[0].mxu0
    %135 = vmatprep.mubr.f32.mxu0 0.0
    %136 = vmatmul.mubr.f32.gmra.mrb[0].mxu0 %v60
    %v137 = vpop.f32.mrb[0].mxu0
    %v138 = vadd.f32 %v53, %v137
    %v139 = vpop.f32.mrb[0].mxu0
    %140 = vdwg.mxu0
    %v141 = vmax.f32 %v133, 0.0
    %v142 = vmax.f32 %v138, 0.0
    %v143 = vld [vmem:[%s3] sm:$0x1]
    %v144 = vld [vmem:[#allocation2] sm:$0x1]
    %146 = vset.pattern.permute.xlu0 0
    %147 = vperm.xlu0 %146, %v144
    %v148 = vpop.permute.xlu0 %147
    %v150 = vlaneseq
    %v151 = vshrl.u32 %v150, 7
    %v152 = vsub.s32 0, %v151
    %v153 = vrot.slane %v148, %v152
    %vm154 = vcmask 121856
    %v156 = vsel %vm154, %v143, 0
    %vm158 = vcmask 1046528
    %v160 = vsel %vm158, %v142, 0
    %162 = vmatprep.subr.mxu0 0.0
    %163 = vmatpush1.msra.mxu0 %v141
    %164 = vmatprep.subr.mxu0 0.0
    %165 = vmatpush1.msra.mxu0 %v160
    %166 = vmatprep.subr.mxu0 0.0
    %167 = vmatpush1.msra.mxu0 0.0
    %168 = vmatprep.subr.mxu0 0.0
    %169 = vmatpush1.msra.mxu0 0.0
    %170 = vmatprep.subr.mxu0 0.0
    %171 = vmatpush1.msra.mxu0 0.0
    %172 = vmatprep.subr.mxu0 0.0
    %173 = vmatpush1.msra.mxu0 0.0
    %174 = vmatprep.subr.mxu0 0.0
    %175 = vmatpush1.msra.mxu0 0.0
    %176 = vmatprep.subr.mxu0 0.0
    %177 = vmatpush1.msra.mxu0 0.0
    %178 = vmatprep.subr.mxu0 0.0
    %179 = vmatpush1.msra.mxu0 0.0
    %180 = vmatprep.subr.mxu0 0.0
    %181 = vmatpush1.msra.mxu0 0.0
    %182 = vmatprep.subr.mxu0 0.0
    %183 = vmatpush1.msra.mxu0 0.0
    %184 = vmatprep.subr.mxu0 0.0
    %185 = vmatpush1.msra.mxu0 0.0
    %186 = vmatprep.subr.mxu0 0.0
    %187 = vmatpush1.msra.mxu0 0.0
    %188 = vmatprep.subr.mxu0 0.0
    %189 = vmatpush1.msra.mxu0 0.0
    %190 = vmatprep.subr.mxu0 0.0
    %191 = vmatpush1.msra.mxu0 0.0
    %192 = vmatprep.subr.mxu0 0.0
    %193 = vmatpush1.msra.mxu0 0.0
    %194 = vmatprep.subr.mxu0 0.0
    %195 = vmatpush1.msra.mxu0 0.0
    %196 = vmatprep.subr.mxu0 0.0
    %197 = vmatpush1.msra.mxu0 0.0
    %198 = vmatprep.subr.mxu0 0.0
    %199 = vmatpush1.msra.mxu0 0.0
    %200 = vmatprep.subr.mxu0 0.0
    %201 = vmatpush1.msra.mxu0 0.0
    %202 = vmatprep.subr.mxu0 0.0
    %203 = vmatpush1.msra.mxu0 0.0
    %204 = vmatprep.subr.mxu0 0.0
    %205 = vmatpush1.msra.mxu0 0.0
    %206 = vmatprep.subr.mxu0 0.0
    %207 = vmatpush1.msra.mxu0 0.0
    %208 = vmatprep.subr.mxu0 0.0
    %209 = vmatpush1.msra.mxu0 0.0
    %210 = vmatprep.subr.mxu0 0.0
    %211 = vmatpush1.msra.mxu0 0.0
    %212 = vmatprep.subr.mxu0 0.0
    %213 = vmatpush1.msra.mxu0 0.0
    %214 = vmatprep.subr.mxu0 0.0
    %215 = vmatpush1.msra.mxu0 0.0
    %216 = vmatprep.subr.mxu0 0.0
    %217 = vmatpush1.msra.mxu0 0.0
    %218 = vmatprep.subr.mxu0 0.0
    %219 = vmatpush1.msra.mxu0 0.0
    %220 = vmatprep.subr.mxu0 0.0
    %221 = vmatpush1.msra.mxu0 0.0
    %222 = vmatprep.subr.mxu0 0.0
    %223 = vmatpush1.msra.mxu0 0.0
    %224 = vmatprep.subr.mxu0 0.0
    %225 = vmatpush1.msra.mxu0 0.0
    %226 = vmatprep.mubr.f32.mxu0 0.0
    %227 = vmatmul.mubr.f32.gmra.mrb[0].mxu0 %v156
    %v228 = vpop.f32.mrb[0].mxu0
    %v229 = vadd.f32 %v153, %v228
    %v230 = vpop.f32.mrb[0].mxu0
    %231 = vdwg.mxu0
    %v232 = vxor.u32 %v229, 2147483648
    %v233 = vmul.f32 %v232, 1.442695
    %v234 = vpow.pop %v233
    %v235 = vadd.f32 %v234, 1.0
    %v236 = vrcp.pop %v235
    %v237 = vmul.f32 1.0, %v236
    %238 = vst [vmem:[#allocation6] sm:$0x1] %v237
    // Predicated region
    $region26: #{tpu_custom_call.1} parent=1 // pred_check
      _
    $region27: #{tpu_custom_call.1} parent=1 // pred_check_branch
      %240 = sbr.rel (0) target = $region29
    $region28: #{tpu_custom_call.1} parent=1 // pred_region
      %s242 = ssub.s32 16, 16
      %243 = vsyncadd [#allocation5], %s242
      %s245 = sshll.u32 [#allocation6], 4
      %s246 = int_to_ptr.vmem [resolvable:$true] %s245
      %248 = dma.vmem_to_hbm [thread:$0]  %s246, 16, %s5, [#allocation5]
    $region29: #{tpu_custom_call.1} parent=1 // pred_fallthru
      _
    // Predicated region
    $region30: #{tpu_custom_call.1} parent=1 // pred_check
      _
    $region31: #{tpu_custom_call.1} parent=1 // pred_check_branch
      %250 = sbr.rel (0) target = $region33
    $region32: #{tpu_custom_call.1} parent=1 // pred_region
      %251 = dma.done [#allocation5], 16
    $region33: #{tpu_custom_call.1} parent=1 // pred_fallthru
      _
    %252 = vsyncpa [#allocation4], 1
    %253 = vsyncpa [#allocation5], 1

</llo_original>
